<compile_context>
chip_gen: v5e
topology: v5e:2x2
jax: 0.10.0
libtpu: 0.0.40
codegen_flags: <defaults>
</compile_context>

<pallas_src>
import math

import numpy as np
import jax
import jax.numpy as jnp
from jax import lax
from jax.experimental import pallas as pl
from jax.experimental.pallas import tpu as pltpu


_VMEM_LIMIT = 32 * 1024 * 1024   # scoped-VMEM cap; safe on v5e/v6e and v7x (64 MiB phys).
_MASK_VALUE = -1e30              # large *finite* negative -> no exp(-inf - -inf) NaNs.


def _is_v5e():
    try:
        kind = jax.devices()[0].device_kind.lower()
    except Exception:
        return False
    return ("v5 lite" in kind) or ("v5e" in kind) or ("v5lite" in kind)


def _tile_free(dim, target, granule):
    """Tile for a NON-reduction axis. Ragged last blocks are allowed (grid uses
    pl.cdiv, OOB output writes are masked), so never fall back to the full dim."""
    if dim <= target:
        return dim
    t = max((target // granule) * granule, granule)
    best = t
    while t >= granule:
        if dim % t == 0:
            return t
        t -= granule
    return best  # ragged last block


def _tile_reduction(dim, target, granule):
    """Tile for a reduction axis: must divide exactly (OOB reads on a reduction
    axis would contaminate valid outputs)."""
    if dim <= target:
        return dim
    t = (target // granule) * granule
    while t >= granule:
        if dim % t == 0:
            return t
        t -= granule
    # TODO(synk): pad the reduction axis in the wrapper instead of using the full
    # dimension as a single block (VMEM hazard only for very long, prime-ish axes).
    return dim


# ---------------------------------------------------------------------------
# Kernel 1: tiled bias-free linear  y = x @ W_t   (W_t = weight.T, shape (K, N))
# ---------------------------------------------------------------------------
def _matmul_kernel(x_ref, w_ref, o_ref, acc_ref):
    @pl.when(pl.program_id(2) == 0)
    def _():
        acc_ref[...] = jnp.zeros_like(acc_ref)

    acc_ref[...] += jnp.dot(x_ref[...], w_ref[...],
                            preferred_element_type=jnp.float32)

    @pl.when(pl.program_id(2) == pl.num_programs(2) - 1)
    def _():
        o_ref[...] = acc_ref[...].astype(o_ref.dtype)


def linear_no_bias(x2d, w_t, out_dtype, *, tm=512, tn=512, tk=512):
    """x2d: (M, K), w_t: (K, N) -> (M, N); f32 accumulation, bf16/MXU-friendly."""
    m, k = x2d.shape
    k2, n = w_t.shape
    assert k == k2
    row_granule = 16 if x2d.dtype == jnp.bfloat16 else 8   # bf16 packs 2 rows/sublane
    tm = _tile_free(m, tm, row_granule)
    tn = _tile_free(n, tn, 128)
    tk = _tile_reduction(k, tk, 128)
    grid = (pl.cdiv(m, tm), pl.cdiv(n, tn), k // tk)
    cost = pl.CostEstimate(
        flops=2 * m * n * k,
        transcendentals=0,
        bytes_accessed=int(x2d.size * x2d.dtype.itemsize
                           + w_t.size * w_t.dtype.itemsize
                           + m * n * np.dtype(out_dtype).itemsize))
    return pl.pallas_call(
        _matmul_kernel,
        out_shape=jax.ShapeDtypeStruct((m, n), out_dtype),
        grid=grid,
        in_specs=[
            pl.BlockSpec((tm, tk), lambda i, j, kk: (i, kk)),
            pl.BlockSpec((tk, tn), lambda i, j, kk: (kk, j)),
        ],
        out_specs=pl.BlockSpec((tm, tn), lambda i, j, kk: (i, j)),
        scratch_shapes=[pltpu.VMEM((tm, tn), jnp.float32)],
        compiler_params=pltpu.CompilerParams(
            dimension_semantics=("parallel", "parallel", "arbitrary"),
            vmem_limit_bytes=_VMEM_LIMIT,
        ),
        cost_estimate=cost,
    )(x2d, w_t)


# ---------------------------------------------------------------------------
# Kernel 2: flash-style scaled dot-product attention (scale pre-folded into Q)
#   grid = (B, head-groups, Sq tiles, KV tiles); online softmax state in VMEM.
# ---------------------------------------------------------------------------
def _make_flash_kernel(*, grouped, causal, has_mask, tq, tkv):
    def kernel(*refs):
        if has_mask:
            q_ref, k_ref, v_ref, mask_ref, o_ref, m_scr, l_scr, acc_scr = refs
        else:
            q_ref, k_ref, v_ref, o_ref, m_scr, l_scr, acc_scr = refs
            mask_ref = None

        qi = pl.program_id(2)
        ki = pl.program_id(3)

        @pl.when(ki == 0)
        def _():
            m_scr[...] = jnp.full(m_scr.shape, -jnp.inf, jnp.float32)
            l_scr[...] = jnp.zeros(l_scr.shape, jnp.float32)
            acc_scr[...] = jnp.zeros(acc_scr.shape, jnp.float32)

        def compute():
            # Q.K^T contracting Dh (no k.T / XLU transpose); f32 accumulation.
            if grouped:
                s = jnp.einsum("gqd,gkd->gqk", q_ref[...], k_ref[...],
                               preferred_element_type=jnp.float32)
            else:
                s = lax.dot_general(q_ref[...], k_ref[...],
                                    (((1,), (1,)), ((), ())),
                                    preferred_element_type=jnp.float32)
            if has_mask:
                s = s + mask_ref[...].astype(jnp.float32)   # bf16 mask -> f32
            if causal:
                # Mask generated in-kernel: zero mask bytes DMA'd from HBM.
                q_pos = qi * tq + lax.broadcasted_iota(jnp.int32, s.shape, s.ndim - 2)
                k_pos = ki * tkv + lax.broadcasted_iota(jnp.int32, s.shape, s.ndim - 1)
                s = jnp.where(k_pos <= q_pos, s, _MASK_VALUE)

            m_prev = m_scr[...]
            m_new = jnp.maximum(m_prev, jnp.max(s, axis=-1, keepdims=True))
            alpha = jnp.exp(m_prev - m_new)
            p = jnp.exp(s - m_new)
            l_scr[...] = alpha * l_scr[...] + jnp.sum(p, axis=-1, keepdims=True)
            if grouped:
                pv = jnp.einsum("gqk,gkd->gqd", p.astype(v_ref.dtype), v_ref[...],
                                preferred_element_type=jnp.float32)
            else:
                pv = jnp.dot(p.astype(v_ref.dtype), v_ref[...],
                             preferred_element_type=jnp.float32)
            acc_scr[...] = alpha * acc_scr[...] + pv
            m_scr[...] = m_new

        if causal:
            # Skip KV tiles entirely above the causal diagonal (~2x on the
            # attention kernel for long sequences).
            live = (ki * tkv) <= (qi * tq + (tq - 1))
            pl.when(live)(compute)
        else:
            compute()

        # TODO(synk): training-mode dropout on the attention probabilities
        # (nn.Dropout) is identity in eval mode and is not implemented here.
        @pl.when(ki == pl.num_programs(3) - 1)
        def _():
            inv_l = pl.reciprocal(l_scr[...], approx=True)   # EUP slot, ~free
            o_ref[...] = (acc_scr[...] * inv_l).astype(o_ref.dtype)

    return kernel


def flash_attention(q, kv, num_heads, *, mask=None, causal=False,
                    tq_target=None, tkv_target=512):
    """Flash attention over a fused KV tensor.

    Layouts (dispatch on rank):
      packed (Dh % 128 == 0): q (B, Sq, H*Dh), kv (B, Skv, 2*H*Dh) -> (B, Sq, H*Dh)
      grouped head-major    : q (B, H, Sq, Dh), kv (B, 2H, Skv, Dh) -> (B, H, Sq, Dh)
                              (G = 128//Dh heads processed per grid step)
    mask: additive, (mb, mh, Sq, Skv) with mb in {1,B}, mh in {1,H}; streamed as bf16.
    causal=True ignores `mask` and generates/skips the causal pattern in-kernel.
    """
    H = num_heads
    packed = q.ndim == 3
    if packed:
        B, Sq, D = q.shape
        Dh = D // H
        Skv = kv.shape[1]
        assert Dh % 128 == 0, "packed layout requires Dh % 128 == 0"
        G = 1
    else:
        B, Hq, Sq, Dh = q.shape
        assert Hq == H
        Skv = kv.shape[2]
        G = max(1, min(H, 128 // max(Dh, 1)))
        while H % G:
            G -= 1

    if tq_target is None:
        # v6e/v7x MXUs are 256-wide; v5e is 128-wide and store-slot limited.
        tq_target = 128 if _is_v5e() else 256
    row_granule = 16 if q.dtype == jnp.bfloat16 else 8
    tq = _tile_free(Sq, tq_target, row_granule)
    tkv = _tile_reduction(Skv, tkv_target, 128)
    grid = (B, H // G, pl.cdiv(Sq, tq), Skv // tkv)

    has_mask = (mask is not None) and (not causal)

    if packed:
        q_spec = pl.BlockSpec((None, tq, Dh), lambda b, h, qi, ki: (b, qi, h))
        k_spec = pl.BlockSpec((None, tkv, Dh), lambda b, h, qi, ki: (b, ki, h))
        v_spec = pl.BlockSpec((None, tkv, Dh), lambda b, h, qi, ki: (b, ki, H + h))
        out_spec = pl.BlockSpec((None, tq, Dh), lambda b, h, qi, ki: (b, qi, h))
        out_shape = jax.ShapeDtypeStruct((B, Sq, H * Dh), q.dtype)
        scratch = [pltpu.VMEM((tq, 1), jnp.float32),
                   pltpu.VMEM((tq, 1), jnp.float32),
                   pltpu.VMEM((tq, Dh), jnp.float32)]
    else:
        ngk = H // G   # number of K head-groups; V head-groups start at ngk
        q_spec = pl.BlockSpec((None, G, tq, Dh), lambda b, g, qi, ki: (b, g, qi, 0))
        k_spec = pl.BlockSpec((None, G, tkv, Dh), lambda b, g, qi, ki: (b, g, ki, 0))
        v_spec = pl.BlockSpec((None, G, tkv, Dh),
                              lambda b, g, qi, ki: (b, ngk + g, ki, 0))
        out_spec = pl.BlockSpec((None, G, tq, Dh), lambda b, g, qi, ki: (b, g, qi, 0))
        out_shape = jax.ShapeDtypeStruct((B, H, Sq, Dh), q.dtype)
        scratch = [pltpu.VMEM((G, tq, 1), jnp.float32),
                   pltpu.VMEM((G, tq, 1), jnp.float32),
                   pltpu.VMEM((G, tq, Dh), jnp.float32)]

    in_specs = [q_spec, k_spec, v_spec]
    args = [q, kv, kv]
    mask_bytes = 0
    if has_mask:
        mask4 = jnp.asarray(mask)
        while mask4.ndim < 4:
            mask4 = mask4[None]
        # Clamp (-inf would NaN the online softmax) and stream as bf16: half the
        # HBM traffic of an f32 mask that gets re-read B*H times.
        mask4 = jnp.maximum(mask4.astype(jnp.float32), _MASK_VALUE).astype(jnp.bfloat16)
        mb, mh = mask4.shape[0], mask4.shape[1]
        if packed:
            mspec = pl.BlockSpec(
                (None, None, tq, tkv),
                lambda b, h, qi, ki: (b if mb > 1 else 0, h if mh > 1 else 0, qi, ki))
        else:
            if mh > 1:
                assert mh == H, "per-head mask must have exactly H head slices"
                mspec = pl.BlockSpec(
                    (None, G, tq, tkv),
                    lambda b, g, qi, ki: (b if mb > 1 else 0, g, qi, ki))
            else:
                mspec = pl.BlockSpec(
                    (None, None, tq, tkv),
                    lambda b, g, qi, ki: (b if mb > 1 else 0, 0, qi, ki))
        in_specs.append(mspec)
        args.append(mask4)
        mask_bytes = int(mask4.size * mask4.dtype.itemsize)
        # TODO(synk): add pipeline_mode=pl.Buffered(3) on k/v/mask specs if an xprof
        # trace shows exposed DMA in the KV loop.

    kernel = _make_flash_kernel(grouped=not packed, causal=causal,
                                has_mask=has_mask, tq=tq, tkv=tkv)

    flops = 4 * B * H * Sq * Skv * Dh
    if causal:
        flops //= 2   # roughly half the KV tiles are skipped
    cost = pl.CostEstimate(
        flops=int(flops),
        transcendentals=int(B * H * Sq * Skv),
        bytes_accessed=int(q.size * q.dtype.itemsize + kv.size * kv.dtype.itemsize
                           + B * H * Sq * Dh * q.dtype.itemsize + mask_bytes))

    return pl.pallas_call(
        kernel,
        out_shape=out_shape,
        grid=grid,
        in_specs=in_specs,
        out_specs=out_spec,
        scratch_shapes=scratch,
        compiler_params=pltpu.CompilerParams(
            dimension_semantics=("parallel", "parallel", "parallel", "arbitrary"),
            vmem_limit_bytes=_VMEM_LIMIT,
        ),
        cost_estimate=cost,
    )(*args)


# ---------------------------------------------------------------------------
# Full Attention.forward
# ---------------------------------------------------------------------------
def attention_forward(params, x, memory, mask, num_heads, *,
                      causal=False, compute_dtype=jnp.bfloat16):
    B, Sq, D = x.shape
    _, Skv, _ = memory.shape
    H = num_heads
    assert D % H == 0
    Dh = D // H
    out_dtype = x.dtype
    cd = compute_dtype

    # Fold 1/sqrt(Dh) into the Q projection weight (zero runtime cost) and fuse
    # the K and V projections into a single matmul over `memory`.
    wq_t = (params["wq"] * (1.0 / math.sqrt(Dh))).astype(cd).T                   # (D, D)
    wkv_t = jnp.concatenate([params["wk"], params["wv"]], axis=0).astype(cd).T   # (D, 2D)
    wo_t = params["wo"].astype(cd).T                                             # (D, D)

    q2d = linear_no_bias(x.reshape(B * Sq, D).astype(cd), wq_t, cd)              # (B*Sq, D)
    kv2d = linear_no_bias(memory.reshape(B * Skv, D).astype(cd), wkv_t, cd)      # (B*Skv, 2D)

    if Dh % 128 == 0:
        # Head-packed path: no relayout passes over Q/KV/ctx; context written
        # straight into a lane-dense (B, Sq, D) buffer at lane offset h*Dh.
        ctx2d = flash_attention(q2d.reshape(B, Sq, D), kv2d.reshape(B, Skv, 2 * D),
                                H, mask=mask, causal=causal).reshape(B * Sq, D)
    else:
        # Grouped head-major fallback (Dh < 128): G = 128//Dh heads per grid step
        # amortize per-step overhead, mask DMA and softmax bookkeeping.
        # TODO(synk): pack heads into the lane dimension of the packed (B,S,D)
        # activations to eliminate these two HBM relayout transposes entirely.
        q4 = jnp.transpose(q2d.reshape(B, Sq, H, Dh), (0, 2, 1, 3))         # (B,H,Sq,Dh)
        kv4 = jnp.transpose(kv2d.reshape(B, Skv, 2 * H, Dh), (0, 2, 1, 3))  # (B,2H,Skv,Dh)
        ctx = flash_attention(q4, kv4, H, mask=mask, causal=causal)         # (B,H,Sq,Dh)
        ctx2d = jnp.transpose(ctx, (0, 2, 1, 3)).reshape(B * Sq, D)

    out = linear_no_bias(ctx2d, wo_t, out_dtype)
    return out.reshape(B, Sq, D)


# ---------------------------------------------------------------------------
# Pure-JAX reference (mirrors the PyTorch module; matmul operands cast to
# `matmul_dtype` so the comparison tracks the kernel's bf16 MXU precision).
# ---------------------------------------------------------------------------
def attention_reference(params, x, memory, mask, num_heads,
                        matmul_dtype=jnp.float32):
    B, Sq, D = x.shape
    _, Skv, _ = memory.shape
    H = num_heads
    Dh = D // H
    md = matmul_dtype

    def lin(a, w):
        return jnp.dot(a.astype(md), w.T.astype(md),
                       preferred_element_type=jnp.float32)

    def heads(y, S):
        return jnp.transpose(y.reshape(B, S, H, Dh), (0, 2, 1, 3))

    q = heads(lin(x, params["wq"]), Sq)
    k = heads(lin(memory, params["wk"]), Skv)
    v = heads(lin(memory, params["wv"]), Skv)
    s = jnp.einsum("bhqd,bhkd->bhqk", q.astype(md), k.astype(md),
                   preferred_element_type=jnp.float32) / math.sqrt(Dh) + mask
    p = jax.nn.softmax(s, axis=-1)
    o = jnp.einsum("bhqk,bhkd->bhqd", p.astype(md), v.astype(md),
                   preferred_element_type=jnp.float32)
    o = jnp.transpose(o, (0, 2, 1, 3)).reshape(B, Sq, D)
    return lin(o, params["wo"])


# ---------------------------------------------------------------------------
# Test
# ---------------------------------------------------------------------------
def _make_params(key, d_model):
    kq, kk, kv, ko = jax.random.split(key, 4)
    bound = 1.0 / math.sqrt(d_model)  # nn.Linear-style uniform init
    def u(k):
        return jax.random.uniform(k, (d_model, d_model), jnp.float32, -bound, bound)
    return {"wq": u(kq), "wk": u(kk), "wv": u(kv), "wo": u(ko)}


def _run_case(key, B, Sq, Skv, D, H, use_causal_flag):
    kp, kx, km = jax.random.split(key, 3)
    params = _make_params(kp, D)
    x = jax.random.normal(kx, (B, Sq, D), jnp.float32)
    memory = jax.random.normal(km, (B, Skv, D), jnp.float32)

    if use_causal_flag:
        # Kernel generates the causal pattern in-kernel; the reference uses the
        # explicit additive tril mask (identical semantics).
        allowed = jnp.tril(jnp.ones((Sq, Skv), jnp.float32))
        mask = jnp.where(allowed == 1.0, 0.0, -1e9)[None, None, :, :]
        out = attention_forward(params, x, memory, None, H, causal=True)
    else:
        # Padding-style additive mask (last 4 KV positions masked), bf16-streamed.
        keep = jnp.arange(Skv) < (Skv - 4)
        mask = jnp.broadcast_to(
            jnp.where(keep, 0.0, -1e9).astype(jnp.float32)[None, None, None, :],
            (1, 1, Sq, Skv))
        out = attention_forward(params, x, memory, mask, H, causal=False)

    out = jax.block_until_ready(out)
    ref = attention_reference(params, x, memory, mask, H,
                              matmul_dtype=jnp.bfloat16)
    assert out.shape == (B, Sq, D) and out.dtype == x.dtype
    # Tolerance reflects bf16 MXU operands (f32 accumulation / f32 softmax).
    max_diff = float(jnp.max(jnp.abs(out - ref)))
    assert jnp.allclose(out, ref, atol=3e-2, rtol=3e-2), f"max|diff|={max_diff}"


if __name__ == "__main__":
    key = jax.random.PRNGKey(0)
    k1, k2 = jax.random.split(key)
    # Case 1: Dh = 128 -> packed transposeless path; causal mask generated
    # in-kernel (zero mask DMA) with dead-tile skipping.
    _run_case(k1, B=2, Sq=8, Skv=16, D=256, H=2, use_causal_flag=True)
    # Case 2: Dh = 32 < 128 -> grouped head-major path (G=4 heads per grid step,
    # 2 head groups); explicit additive mask streamed as bf16.
    _run_case(k2, B=2, Sq=8, Skv=16, D=256, H=8, use_causal_flag=False)
    print("KERNEL_OK")
</pallas_src>

<mosaic_0001>
module attributes {stable_mosaic.version = 11 : i64} {
  func.func @_matmul_kernel(%arg0: i32, %arg1: i32, %arg2: i32, %arg3: memref<16x256xbf16, #tpu.memory_space<vmem>>, %arg4: memref<256x256xbf16, #tpu.memory_space<vmem>>, %arg5: memref<16x256xbf16, #tpu.memory_space<vmem>>, %arg6: memref<16x256xf32, #tpu.memory_space<vmem>>) attributes {dimension_semantics = [#tpu.dimension_semantics<parallel>, #tpu.dimension_semantics<parallel>, #tpu.dimension_semantics<arbitrary>], iteration_bounds = array<i64: 1, 1, 1>, scalar_prefetch = 0 : i64, scratch_operands = 1 : i64, tpu.core_type = #tpu.core_type<tc>, window_params = [{transform_indices = @transform_0, window_bounds = array<i64: 16, 256>}, {transform_indices = @transform_1, window_bounds = array<i64: 256, 256>}, {transform_indices = @transform_2, window_bounds = array<i64: 16, 256>}]} {
    %c0_i32 = arith.constant 0 : i32
    %0 = arith.cmpi eq, %arg2, %c0_i32 : i32
    %1 = arith.extui %0 : i1 to i32
    %c0_i32_0 = arith.constant 0 : i32
    %2 = arith.cmpi ne, %1, %c0_i32_0 : i32
    scf.if %2 {
      %cst_10 = arith.constant 0.000000e+00 : f32
      %12 = vector.broadcast %cst_10 : f32 to vector<16x256xf32>
      %c0_11 = arith.constant 0 : index
      %c0_12 = arith.constant 0 : index
      %13 = vector.load %arg6[%c0_11, %c0_12] : memref<16x256xf32, #tpu.memory_space<vmem>>, vector<16x256xf32>
      tpu.vector_store %arg6[%c0_11, %c0_12], %12 {strides = array<i32>} : memref<16x256xf32, #tpu.memory_space<vmem>>, vector<16x256xf32>,
    } else {
    }
    %c0 = arith.constant 0 : index
    %c0_1 = arith.constant 0 : index
    %3 = vector.load %arg6[%c0, %c0_1] : memref<16x256xf32, #tpu.memory_space<vmem>>, vector<16x256xf32>
    %c0_2 = arith.constant 0 : index
    %c0_3 = arith.constant 0 : index
    %4 = vector.load %arg3[%c0_2, %c0_3] : memref<16x256xbf16, #tpu.memory_space<vmem>>, vector<16x256xbf16>
    %c0_4 = arith.constant 0 : index
    %c0_5 = arith.constant 0 : index
    %5 = vector.load %arg4[%c0_4, %c0_5] : memref<256x256xbf16, #tpu.memory_space<vmem>>, vector<256x256xbf16>
    %cst = arith.constant dense<0.000000e+00> : vector<16x256xf32>
    %6 = tpu.matmul %4, %5, %cst {dimension_numbers = #tpu.dot_dimension_numbers<[1], [0], [0], [1], [0, 0, 1, 1], [], []>} : vector<16x256xbf16>, vector<256x256xbf16>, vector<16x256xf32> -> vector<16x256xf32>
    %7 = arith.addf %3, %6 : vector<16x256xf32>
    %c0_6 = arith.constant 0 : index
    %c0_7 = arith.constant 0 : index
    %8 = vector.load %arg6[%c0_6, %c0_7] : memref<16x256xf32, #tpu.memory_space<vmem>>, vector<16x256xf32>
    tpu.vector_store %arg6[%c0_6, %c0_7], %7 {strides = array<i32>} : memref<16x256xf32, #tpu.memory_space<vmem>>, vector<16x256xf32>,
    %c0_i32_8 = arith.constant 0 : i32
    %9 = arith.cmpi eq, %arg2, %c0_i32_8 : i32
    %10 = arith.extui %9 : i1 to i32
    %c0_i32_9 = arith.constant 0 : i32
    %11 = arith.cmpi ne, %10, %c0_i32_9 : i32
    scf.if %11 {
      %c0_10 = arith.constant 0 : index
      %c0_11 = arith.constant 0 : index
      %12 = vector.load %arg6[%c0_10, %c0_11] : memref<16x256xf32, #tpu.memory_space<vmem>>, vector<16x256xf32>
      %13 = arith.truncf %12 : vector<16x256xf32> to vector<16x256xbf16>
      %c0_12 = arith.constant 0 : index
      %c0_13 = arith.constant 0 : index
      %14 = vector.load %arg5[%c0_12, %c0_13] : memref<16x256xbf16, #tpu.memory_space<vmem>>, vector<16x256xbf16>
      tpu.vector_store %arg5[%c0_12, %c0_13], %13 {strides = array<i32>} : memref<16x256xbf16, #tpu.memory_space<vmem>>, vector<16x256xbf16>,
    } else {
    }
    return
  }
  func.func @transform_0(%arg0: i32, %arg1: i32, %arg2: i32) -> (i32, i32) {
    %c0_i32 = arith.constant 0 : i32
    return %arg0, %arg2 : i32, i32
  }
  func.func @transform_1(%arg0: i32, %arg1: i32, %arg2: i32) -> (i32, i32) {
    %c0_i32 = arith.constant 0 : i32
    return %arg2, %arg1 : i32, i32
  }
  func.func @transform_2(%arg0: i32, %arg1: i32, %arg2: i32) -> (i32, i32) {
    %c0_i32 = arith.constant 0 : i32
    return %arg0, %arg1 : i32, i32
  }
}

</mosaic_0001>

<llo_original>
// kernel: tpu_custom_call.1
$region0: #{tpu_custom_call.1}
  #allocation0 [shape = 'u32[]', space=smem, size = 0x4, offset = 0x4, fixed_abs, tag = 'smem constant byte address 0x4 - core index']
  #allocation1 [shape = 'u32[72,128]{1,0:T(1,128)}', space=vmem, size = 0x9000, scoped, tag = 'internal scratch']
  #allocation2 [shape = 'f32[16,256]{1,0:T(8,128)}', space=vmem, size = 0x4000, scoped, tag = 'scratch operand']
  %s0 = inlined_call_operand.hbm [shape: bf16[16,256], index: 0, kind: input, shape index: {}]
  %s1 = inlined_call_operand.hbm [shape: bf16[256,256], index: 1, kind: input, shape index: {}]
  %s2 = inlined_call_operand.hbm [shape: bf16[16,256], index: 2, kind: output, shape index: {}]
  %s3 = sld [smem:[#allocation0]]
  $region34: #{tpu_custom_call.1} parent=0
    _
  %s5 = ssub.s32 1, %s3
  %s6 = scalar_select 0, %s5, %s3
  $region1: #{tpu_custom_call.1} parent=0
    #allocation3 [shape = 'u8[8192]{0}', space=vmem, size = 0x2000, scoped, tag = 'input window, operand 0, single buffered']
    #allocation4 [shape = 's32[1]{0}', space=sflag, size = 0x4, scoped, tag = 'scoped memory for tpu_custom_call.1']
    #allocation5 [shape = 's32[1]{0}', space=sflag, size = 0x4, scoped, tag = 'scoped memory for tpu_custom_call.1']
    #allocation6 [shape = 'u8[131072]{0}', space=vmem, size = 0x20000, scoped, tag = 'input window, operand 1, single buffered']
    #allocation7 [shape = 's32[1]{0}', space=sflag, size = 0x4, scoped, tag = 'scoped memory for tpu_custom_call.1']
    #allocation8 [shape = 'u8[8192]{0}', space=vmem, size = 0x2000, scoped, tag = 'output window, operand 0, single buffered']
    %7 = vsyncpa [#allocation4], 0
    %8 = vsyncpa [#allocation7], 0
    %9 = vsyncpa [#allocation5], 0
    // Predicated region
    $region2: #{tpu_custom_call.1} parent=1 // pred_check
      _
    $region3: #{tpu_custom_call.1} parent=1 // pred_check_branch
      %11 = sbr.rel (0) target = $region5
    $region4: #{tpu_custom_call.1} parent=1 // pred_region
      %13 = vsyncadd [#allocation4], 0
      %s14 = sshll.u32 %s0, 4
      %s15 = int_to_ptr.hbm [resolvable:$true] %s14
      %s16 = sshll.u32 [#allocation3], 4
      %s17 = int_to_ptr.vmem [resolvable:$true] %s16
      %22 = dma.hbm_to_vmem [thread:$0]  %s15, 256, %s17, [#allocation4], 128, 128, 8
    $region5: #{tpu_custom_call.1} parent=1 // pred_fallthru
      _
    // Predicated region
    $region6: #{tpu_custom_call.1} parent=1 // pred_check
      _
    $region7: #{tpu_custom_call.1} parent=1 // pred_check_branch
      %24 = sbr.rel (0) target = $region9
    $region8: #{tpu_custom_call.1} parent=1 // pred_region
      %26 = vsyncadd [#allocation7], 0
      %s27 = sshll.u32 %s1, 4
      %s28 = int_to_ptr.hbm [resolvable:$true] %s27
      %s29 = sshll.u32 [#allocation6], 4
      %s30 = int_to_ptr.vmem [resolvable:$true] %s29
      %35 = dma.hbm_to_vmem [thread:$0]  %s28, 4096, %s30, [#allocation7], 128, 128, 8
    $region9: #{tpu_custom_call.1} parent=1 // pred_fallthru
      _
    // Predicated region
    $region10: #{tpu_custom_call.1} parent=1 // pred_check
      _
    $region11: #{tpu_custom_call.1} parent=1 // pred_check_branch
      %37 = sbr.rel (0) target = $region13
    $region12: #{tpu_custom_call.1} parent=1 // pred_region
      %39 = dma.done [#allocation4], 256
    $region13: #{tpu_custom_call.1} parent=1 // pred_fallthru
      _
    // Predicated region
    $region14: #{tpu_custom_call.1} parent=1 // pred_check
      _
    $region15: #{tpu_custom_call.1} parent=1 // pred_check_branch
      %41 = sbr.rel (0) target = $region17
    $region16: #{tpu_custom_call.1} parent=1 // pred_region
      %43 = dma.done [#allocation7], 4096
    $region17: #{tpu_custom_call.1} parent=1 // pred_fallthru
      _
    %p44 = scmp.eq.s32.totalorder 0, 0
    // Predicated region
    $region18: #{tpu_custom_call.1} parent=1 // pred_check
      %p45 = pneg %p44
    $region19: #{tpu_custom_call.1} parent=1 // pred_check_branch
      %47 = sbr.rel (%p45) target = $region21
    $region20: #{tpu_custom_call.1} parent=1 // pred_region
      %48 = vst [vmem:[#allocation2] sm:$0xff] 0.0
      %49 = vst [vmem:[#allocation2 + $0x8] sm:$0xff] 0.0
      %50 = vst [vmem:[#allocation2 + $0x10] sm:$0xff] 0.0
      %51 = vst [vmem:[#allocation2 + $0x18] sm:$0xff] 0.0
    $region21: #{tpu_custom_call.1} parent=1 // pred_fallthru
      _
    %v52 = vld [vmem:[#allocation2] sm:$0xff]
    %v53 = vld [vmem:[#allocation2 + $0x8] sm:$0xff]
    %v54 = vld [vmem:[#allocation2 + $0x10] sm:$0xff]
    %v55 = vld [vmem:[#allocation2 + $0x18] sm:$0xff]
    %v56 = vld [vmem:[#allocation3] sm:$0xff]
    %v57 = vld [vmem:[#allocation3 + $0x8] sm:$0xff]
    %v58 = vld [vmem:[#allocation6] sm:$0xff]
    %v59 = vld [vmem:[#allocation6 + $0x8] sm:$0xff]
    %v60 = vld [vmem:[#allocation6 + $0x10] sm:$0xff]
    %v61 = vld [vmem:[#allocation6 + $0x18] sm:$0xff]
    %v62 = vld [vmem:[#allocation6 + $0x20] sm:$0xff]
    %v63 = vld [vmem:[#allocation6 + $0x28] sm:$0xff]
    %v64 = vld [vmem:[#allocation6 + $0x30] sm:$0xff]
    %v65 = vld [vmem:[#allocation6 + $0x38] sm:$0xff]
    %v66 = vld [vmem:[#allocation6 + $0x40] sm:$0xff]
    %v67 = vld [vmem:[#allocation6 + $0x48] sm:$0xff]
    %v68 = vld [vmem:[#allocation6 + $0x50] sm:$0xff]
    %v69 = vld [vmem:[#allocation6 + $0x58] sm:$0xff]
    %v70 = vld [vmem:[#allocation6 + $0x60] sm:$0xff]
    %v71 = vld [vmem:[#allocation6 + $0x68] sm:$0xff]
    %v72 = vld [vmem:[#allocation6 + $0x70] sm:$0xff]
    %v73 = vld [vmem:[#allocation6 + $0x78] sm:$0xff]
    %v74 = vld [vmem:[#allocation6 + $0x80] sm:$0xff]
    %v75 = vld [vmem:[#allocation6 + $0x88] sm:$0xff]
    %v76 = vld [vmem:[#allocation6 + $0x90] sm:$0xff]
    %v77 = vld [vmem:[#allocation6 + $0x98] sm:$0xff]
    %v78 = vld [vmem:[#allocation6 + $0xa0] sm:$0xff]
    %v79 = vld [vmem:[#allocation6 + $0xa8] sm:$0xff]
    %v80 = vld [vmem:[#allocation6 + $0xb0] sm:$0xff]
    %v81 = vld [vmem:[#allocation6 + $0xb8] sm:$0xff]
    %v82 = vld [vmem:[#allocation6 + $0xc0] sm:$0xff]
    %v83 = vld [vmem:[#allocation6 + $0xc8] sm:$0xff]
    %v84 = vld [vmem:[#allocation6 + $0xd0] sm:$0xff]
    %v85 = vld [vmem:[#allocation6 + $0xd8] sm:$0xff]
    %v86 = vld [vmem:[#allocation6 + $0xe0] sm:$0xff]
    %v87 = vld [vmem:[#allocation6 + $0xe8] sm:$0xff]
    %v88 = vld [vmem:[#allocation6 + $0xf0] sm:$0xff]
    %v89 = vld [vmem:[#allocation6 + $0xf8] sm:$0xff]
    %v92 = vunpack.c.l.b16 %v56
    %v93 = vunpack.c.h.b16 %v56
    %v94 = vunpack.c.l.b16 %v57
    %v95 = vunpack.c.h.b16 %v57
    %v96 = vpack.c.b16 %v94, %v92
    %v97 = vpack.c.b16 %v95, %v93
    %v132 = vunpack.c.l.b16 %v58
    %v133 = vunpack.c.h.b16 %v58
    %v134 = vunpack.c.l.b16 %v59
    %v135 = vunpack.c.h.b16 %v59
    %v136 = vunpack.c.l.b16 %v60
    %v137 = vunpack.c.h.b16 %v60
    %v138 = vunpack.c.l.b16 %v61
    %v139 = vunpack.c.h.b16 %v61
    %v140 = vunpack.c.l.b16 %v62
    %v141 = vunpack.c.h.b16 %v62
    %v142 = vunpack.c.l.b16 %v63
    %v143 = vunpack.c.h.b16 %v63
    %v144 = vunpack.c.l.b16 %v64
    %v145 = vunpack.c.h.b16 %v64
    %v146 = vunpack.c.l.b16 %v65
    %v147 = vunpack.c.h.b16 %v65
    %v148 = vunpack.c.l.b16 %v66
    %v149 = vunpack.c.h.b16 %v66
    %v150 = vunpack.c.l.b16 %v67
    %v151 = vunpack.c.h.b16 %v67
    %v152 = vunpack.c.l.b16 %v68
    %v153 = vunpack.c.h.b16 %v68
    %v154 = vunpack.c.l.b16 %v69
    %v155 = vunpack.c.h.b16 %v69
    %v156 = vunpack.c.l.b16 %v70
    %v157 = vunpack.c.h.b16 %v70
    %v158 = vunpack.c.l.b16 %v71
    %v159 = vunpack.c.h.b16 %v71
    %v160 = vunpack.c.l.b16 %v72
    %v161 = vunpack.c.h.b16 %v72
    %v162 = vunpack.c.l.b16 %v73
    %v163 = vunpack.c.h.b16 %v73
    %v164 = vunpack.c.l.b16 %v74
    %v165 = vunpack.c.h.b16 %v74
    %v166 = vunpack.c.l.b16 %v75
    %v167 = vunpack.c.h.b16 %v75
    %v168 = vunpack.c.l.b16 %v76
    %v169 = vunpack.c.h.b16 %v76
    %v170 = vunpack.c.l.b16 %v77
    %v171 = vunpack.c.h.b16 %v77
    %v172 = vunpack.c.l.b16 %v78
    %v173 = vunpack.c.h.b16 %v78
    %v174 = vunpack.c.l.b16 %v79
    %v175 = vunpack.c.h.b16 %v79
    %v176 = vunpack.c.l.b16 %v80
    %v177 = vunpack.c.h.b16 %v80
    %v178 = vunpack.c.l.b16 %v81
    %v179 = vunpack.c.h.b16 %v81
    %v180 = vunpack.c.l.b16 %v82
    %v181 = vunpack.c.h.b16 %v82
    %v182 = vunpack.c.l.b16 %v83
    %v183 = vunpack.c.h.b16 %v83
    %v184 = vunpack.c.l.b16 %v84
    %v185 = vunpack.c.h.b16 %v84
    %v186 = vunpack.c.l.b16 %v85
    %v187 = vunpack.c.h.b16 %v85
    %v188 = vunpack.c.l.b16 %v86
    %v189 = vunpack.c.h.b16 %v86
    %v190 = vunpack.c.l.b16 %v87
    %v191 = vunpack.c.h.b16 %v87
    %v192 = vunpack.c.l.b16 %v88
    %v193 = vunpack.c.h.b16 %v88
    %v194 = vunpack.c.l.b16 %v89
    %v195 = vunpack.c.h.b16 %v89
    %v196 = vpack.c.b16 %v134, %v132
    %v197 = vpack.c.b16 %v135, %v133
    %v198 = vpack.c.b16 %v138, %v136
    %v199 = vpack.c.b16 %v139, %v137
    %v200 = vpack.c.b16 %v142, %v140
    %v201 = vpack.c.b16 %v143, %v141
    %v202 = vpack.c.b16 %v146, %v144
    %v203 = vpack.c.b16 %v147, %v145
    %v204 = vpack.c.b16 %v150, %v148
    %v205 = vpack.c.b16 %v151, %v149
    %v206 = vpack.c.b16 %v154, %v152
    %v207 = vpack.c.b16 %v155, %v153
    %v208 = vpack.c.b16 %v158, %v156
    %v209 = vpack.c.b16 %v159, %v157
    %v210 = vpack.c.b16 %v162, %v160
    %v211 = vpack.c.b16 %v163, %v161
    %v212 = vpack.c.b16 %v166, %v164
    %v213 = vpack.c.b16 %v167, %v165
    %v214 = vpack.c.b16 %v170, %v168
    %v215 = vpack.c.b16 %v171, %v169
    %v216 = vpack.c.b16 %v174, %v172
    %v217 = vpack.c.b16 %v175, %v173
    %v218 = vpack.c.b16 %v178, %v176
    %v219 = vpack.c.b16 %v179, %v177
    %v220 = vpack.c.b16 %v182, %v180
    %v221 = vpack.c.b16 %v183, %v181
    %v222 = vpack.c.b16 %v186, %v184
    %v223 = vpack.c.b16 %v187, %v185
    %v224 = vpack.c.b16 %v190, %v188
    %v225 = vpack.c.b16 %v191, %v189
    %v226 = vpack.c.b16 %v194, %v192
    %v227 = vpack.c.b16 %v195, %v193
    %260 = vmatpush.bf16.msra.mxu0 %v210
    %261 = vmatpush.bf16.msra.mxu0 %v208
    %262 = vmatpush.bf16.msra.mxu0 %v206
    %263 = vmatpush.bf16.msra.mxu0 %v204
    %264 = vmatpush.bf16.msra.mxu0 %v202
    %265 = vmatpush.bf16.msra.mxu0 %v200
    %266 = vmatpush.bf16.msra.mxu0 %v198
    %267 = vmatpush.bf16.msra.mxu0 %v196
    %268 = vmatmul.bf16.gmra.mxu0 %v96
    %v269 = vpop.f32.mrf.mxu0
    %v270 = vadd.f32 0.0, %v269
    %v271 = vpop.f32.mrf.mxu0
    %v272 = vadd.f32 0.0, %v271
    %273 = vdwg.mxu0
    %274 = vmatpush.bf16.msra.mxu0 %v226
    %275 = vmatpush.bf16.msra.mxu0 %v224
    %276 = vmatpush.bf16.msra.mxu0 %v222
    %277 = vmatpush.bf16.msra.mxu0 %v220
    %278 = vmatpush.bf16.msra.mxu0 %v218
    %279 = vmatpush.bf16.msra.mxu0 %v216
    %280 = vmatpush.bf16.msra.mxu0 %v214
    %281 = vmatpush.bf16.msra.mxu0 %v212
    %282 = vmatmul.bf16.gmra.mxu0 %v97
    %v283 = vpop.f32.mrf.mxu0
    %v284 = vadd.f32 %v270, %v283
    %v285 = vpop.f32.mrf.mxu0
    %v286 = vadd.f32 %v272, %v285
    %287 = vdwg.mxu0
    %288 = vmatpush.bf16.msra.mxu0 %v211
    %289 = vmatpush.bf16.msra.mxu0 %v209
    %290 = vmatpush.bf16.msra.mxu0 %v207
    %291 = vmatpush.bf16.msra.mxu0 %v205
    %292 = vmatpush.bf16.msra.mxu0 %v203
    %293 = vmatpush.bf16.msra.mxu0 %v201
    %294 = vmatpush.bf16.msra.mxu0 %v199
    %295 = vmatpush.bf16.msra.mxu0 %v197
    %296 = vmatmul.bf16.gmra.mxu0 %v96
    %v297 = vpop.f32.mrf.mxu0
    %v298 = vadd.f32 0.0, %v297
    %v299 = vpop.f32.mrf.mxu0
    %v300 = vadd.f32 0.0, %v299
    %301 = vdwg.mxu0
    %302 = vmatpush.bf16.msra.mxu0 %v227
    %303 = vmatpush.bf16.msra.mxu0 %v225
    %304 = vmatpush.bf16.msra.mxu0 %v223
    %305 = vmatpush.bf16.msra.mxu0 %v221
    %306 = vmatpush.bf16.msra.mxu0 %v219
    %307 = vmatpush.bf16.msra.mxu0 %v217
    %308 = vmatpush.bf16.msra.mxu0 %v215
    %309 = vmatpush.bf16.msra.mxu0 %v213
    %310 = vmatmul.bf16.gmra.mxu0 %v97
    %v311 = vpop.f32.mrf.mxu0
    %v312 = vadd.f32 %v298, %v311
    %v313 = vpop.f32.mrf.mxu0
    %v314 = vadd.f32 %v300, %v313
    %315 = vdwg.mxu0
    %v316 = vadd.f32 %v52, %v284
    %v317 = vadd.f32 %v53, %v312
    %v318 = vadd.f32 %v54, %v286
    %v319 = vadd.f32 %v55, %v314
    %320 = vst [vmem:[#allocation2] sm:$0xff] %v316
    %321 = vst [vmem:[#allocation2 + $0x8] sm:$0xff] %v317
    %322 = vst [vmem:[#allocation2 + $0x10] sm:$0xff] %v318
    %323 = vst [vmem:[#allocation2 + $0x18] sm:$0xff] %v319
    // Predicated region
    $region22: #{tpu_custom_call.1} parent=1 // pred_check
      %p324 = pneg %p44
    $region23: #{tpu_custom_call.1} parent=1 // pred_check_branch
      %326 = sbr.rel (%p324) target = $region25
    $region24: #{tpu_custom_call.1} parent=1 // pred_region
      %v327 = vld [vmem:[#allocation2] sm:$0xff]
      %v328 = vld [vmem:[#allocation2 + $0x8] sm:$0xff]
      %v329 = vld [vmem:[#allocation2 + $0x10] sm:$0xff]
      %v330 = vld [vmem:[#allocation2 + $0x18] sm:$0xff]
      %v331 = vpack.c.bf16 %v328, %v327
      %v332 = vpack.c.bf16 %v330, %v329
      %333 = vst [vmem:[#allocation8] sm:$0xff] %v331
      %334 = vst [vmem:[#allocation8 + $0x8] sm:$0xff] %v332
    $region25: #{tpu_custom_call.1} parent=1 // pred_fallthru
      _
    // Predicated region
    $region26: #{tpu_custom_call.1} parent=1 // pred_check
      _
    $region27: #{tpu_custom_call.1} parent=1 // pred_check_branch
      %336 = sbr.rel (0) target = $region29
    $region28: #{tpu_custom_call.1} parent=1 // pred_region
      %338 = vsyncadd [#allocation5], 0
      %s339 = sshll.u32 [#allocation8], 4
      %s340 = int_to_ptr.vmem [resolvable:$true] %s339
      %s341 = sshll.u32 %s2, 4
      %s342 = int_to_ptr.hbm [resolvable:$true] %s341
      %347 = dma.vmem_to_hbm [thread:$0]  %s340, 256, %s342, [#allocation5], 128, 128, 8
    $region29: #{tpu_custom_call.1} parent=1 // pred_fallthru
      _
    // Predicated region
    $region30: #{tpu_custom_call.1} parent=1 // pred_check
      _
    $region31: #{tpu_custom_call.1} parent=1 // pred_check_branch
      %349 = sbr.rel (0) target = $region33
    $region32: #{tpu_custom_call.1} parent=1 // pred_region
      %351 = dma.done [#allocation5], 256
    $region33: #{tpu_custom_call.1} parent=1 // pred_fallthru
      _
    %352 = vsyncpa [#allocation4], 1
    %353 = vsyncpa [#allocation7], 1
    %354 = vsyncpa [#allocation5], 1

</llo_original>
